<compile_context>
chip_gen: v5e
topology: v5e:2x2
jax: 0.10.0
libtpu: 0.0.40
codegen_flags: <defaults>
</compile_context>

<pallas_src>
import functools

import numpy as np
import jax
import jax.numpy as jnp
from jax.experimental import pallas as pl
from jax.experimental.pallas import tpu as pltpu

GAMMA_RELU = 1.7128585504496627

_LANE = 128


def _vmem_limit_bytes():
    """Generation-aware scoped-VMEM budget."""
    cap = 64 * 1024 * 1024                      # safe default for every gen
    try:
        cap = int(pltpu.get_tpu_info().vmem_capacity_bytes)
    except Exception:
        pass
    # ~3/4 of physical VMEM, never below the 32 MiB default scoped limit.
    return max(32 * 1024 * 1024, min((cap * 3) // 4, 100 * 1024 * 1024))


def _pick_tile_lanes(S, rows, itemsize, block_budget_bytes, override=None):
    """Lane tile: as many lanes as fill one block budget (multiple of 128)."""
    if override is not None:
        t = max(_LANE, (int(override) // _LANE) * _LANE)
        return S if t >= S else t
    if rows * S * itemsize <= block_budget_bytes:
        return S                                # full extent (exempt from 128 rule)
    t = (block_budget_bytes // (rows * itemsize)) // _LANE * _LANE
    return max(_LANE, int(t))


def _fc_scale(mean_col, w1t, b1_row, w2, b2_col):
    """Per-channel SE scale without transposes or MXU matmuls.

    mean_col: (C,1) f32; w1t: (C,Ch); b1_row: (1,Ch); w2: (C,Ch); b2_col: (C,1).
    Returns the (C,1) f32 scale in [0, 2]: 2*sigmoid(fc2(gamma*relu(fc1(mean)))).
    """
    h = jnp.sum(w1t * mean_col, axis=0, keepdims=True) + b1_row       # (1, Ch)
    h = GAMMA_RELU * jnp.maximum(h, 0.0)                              # scaled ReLU
    z = jnp.sum(w2 * h, axis=-1, keepdims=True) + b2_col              # (C, 1)
    return 2.0 / (1.0 + jnp.exp(-z))                                  # 2 * sigmoid


# --------------------- fused single-pass kernel (grid = (B,)) ---------------------
def _fused_kernel(x_ref, w1t_ref, b1_ref, w2_ref, b2_ref, o_ref, *, inv_s):
    # x_ref / o_ref: (1, C, S) in x.dtype; one full batch slice resident in VMEM.
    x = x_ref[0]                                                      # (C, S)
    ssum = jnp.sum(x, axis=-1, dtype=jnp.float32, keepdims=True)      # (C, 1) f32
    scale = _fc_scale(ssum * inv_s, w1t_ref[...], b1_ref[...],
                      w2_ref[...], b2_ref[...])
    o_ref[0] = x * scale.astype(x.dtype)


# ----------- two-pass fallback: pass 1 = tiled sum + FC epilogue -> scale ----------
def _sum_fc_kernel(x_ref, w1t_ref, b1_ref, w2_ref, b2_ref, scale_ref, acc_ref,
                   *, tS, S, nS, mask_last, inv_s):
    s = pl.program_id(1)

    @pl.when(s == 0)
    def _init():
        acc_ref[...] = jnp.zeros_like(acc_ref)

    def tile_sum(masked):
        x = x_ref[0]                                                  # (C, tS)
        if masked:
            lane = jax.lax.broadcasted_iota(jnp.int32, x.shape, 1)
            x = jnp.where(s * tS + lane < S, x, jnp.zeros_like(x))
        return jnp.sum(x, axis=-1, dtype=jnp.float32, keepdims=True)  # (C, 1)

    if mask_last:
        @pl.when(s != nS - 1)
        def _acc_full():
            acc_ref[...] += tile_sum(False)

        @pl.when(s == nS - 1)
        def _acc_masked():
            acc_ref[...] += tile_sum(True)
    else:
        acc_ref[...] += tile_sum(False)

    @pl.when(s == nS - 1)
    def _finalize():
        scale = _fc_scale(acc_ref[...] * inv_s, w1t_ref[...], b1_ref[...],
                          w2_ref[...], b2_ref[...])
        scale_ref[0] = scale.astype(scale_ref.dtype)


# ------------------- two-pass fallback: pass 2 = streamed rescale ------------------
def _apply_scale_kernel(x_ref, scale_ref, o_ref):
    # x_ref / o_ref: (B*C, tS) in x.dtype; scale_ref: (B*C, 1) pre-cast to x.dtype.
    o_ref[...] = x_ref[...] * scale_ref[...]


@functools.partial(jax.jit, static_argnames=("force_two_pass", "tile_lanes"))
def se_unit(x, w1, b1, w2, b2, *, force_two_pass=False, tile_lanes=None):
    """x: (B, C, *spatial); w1: (Ch, C); b1: (Ch,); w2: (C, Ch); b2: (C,)."""
    B, C = x.shape[0], x.shape[1]
    S = int(np.prod(x.shape[2:]))
    Ch = w1.shape[0]
    itemsize = x.dtype.itemsize
    nbytes = B * C * S * itemsize
    inv_s = 1.0 / S

    x_flat = x.reshape(B, C, S)

    # Kernel-friendly f32 weight layouts (transpose-free in-kernel FC).
    w1t = jnp.asarray(w1, jnp.float32).T.reshape(C, Ch)
    b1r = jnp.asarray(b1, jnp.float32).reshape(1, Ch)
    w2m = jnp.asarray(w2, jnp.float32).reshape(C, Ch)
    b2c = jnp.asarray(b2, jnp.float32).reshape(C, 1)

    vmem_limit = _vmem_limit_bytes()

    # --------------------------- fused single-pass path ---------------------------
    slice_bytes = C * S * itemsize
    fused_bytes = 4 * slice_bytes + 2 * C * S * 4 + (1 << 20)   # 2x(in+out) + f32 temps
    use_fused = ((not force_two_pass) and tile_lanes is None
                 and fused_bytes <= int(vmem_limit * 0.8))

    if use_fused:
        out_flat = pl.pallas_call(
            functools.partial(_fused_kernel, inv_s=inv_s),
            out_shape=jax.ShapeDtypeStruct((B, C, S), x.dtype),
            grid=(B,),
            in_specs=[pl.BlockSpec((1, C, S), lambda b: (b, 0, 0)),
                      pl.BlockSpec((C, Ch), lambda b: (0, 0)),
                      pl.BlockSpec((1, Ch), lambda b: (0, 0)),
                      pl.BlockSpec((C, Ch), lambda b: (0, 0)),
                      pl.BlockSpec((C, 1), lambda b: (0, 0))],
            out_specs=pl.BlockSpec((1, C, S), lambda b: (b, 0, 0)),
            compiler_params=pltpu.CompilerParams(
                dimension_semantics=("parallel",),
                vmem_limit_bytes=vmem_limit),
            cost_estimate=pl.CostEstimate(
                flops=3 * B * C * S + 4 * B * C * Ch,
                transcendentals=B * C,
                bytes_accessed=2 * nbytes),
        )(x_flat, w1t, b1r, w2m, b2c)
        return out_flat.reshape(x.shape)

    # ------------------------------ two-pass fallback ------------------------------
    stream_budget = int(vmem_limit * 0.6)

    # ---- pass 1: per-(B, C) spatial sum with FC epilogue -> per-channel scale ----
    tS1 = _pick_tile_lanes(S, C, itemsize, stream_budget // 2, tile_lanes)
    nS1 = int(pl.cdiv(S, tS1))
    mask_last = (S % tS1) != 0

    scale = pl.pallas_call(
        functools.partial(_sum_fc_kernel, tS=tS1, S=S, nS=nS1,
                          mask_last=mask_last, inv_s=inv_s),
        out_shape=jax.ShapeDtypeStruct((B, C, 1), x.dtype),
        grid=(B, nS1),
        in_specs=[pl.BlockSpec((1, C, tS1), lambda b, s: (b, 0, s)),
                  pl.BlockSpec((C, Ch), lambda b, s: (0, 0)),
                  pl.BlockSpec((1, Ch), lambda b, s: (0, 0)),
                  pl.BlockSpec((C, Ch), lambda b, s: (0, 0)),
                  pl.BlockSpec((C, 1), lambda b, s: (0, 0))],
        out_specs=pl.BlockSpec((1, C, 1), lambda b, s: (b, 0, 0)),
        scratch_shapes=[pltpu.VMEM((C, 1), jnp.float32)],
        compiler_params=pltpu.CompilerParams(
            dimension_semantics=("parallel", "arbitrary"),
            vmem_limit_bytes=vmem_limit),
        cost_estimate=pl.CostEstimate(
            flops=B * C * S + 4 * B * C * Ch,
            transcendentals=B * C,
            bytes_accessed=nbytes + B * C * itemsize),
    )(x_flat, w1t, b1r, w2m, b2c)

    # ---- pass 2: stream x again (batch folded into the sublane dim) and rescale ----
    rows2 = B * C
    tS2 = _pick_tile_lanes(S, rows2, itemsize, stream_budget // 4, tile_lanes)
    nS2 = int(pl.cdiv(S, tS2))

    out2 = pl.pallas_call(
        _apply_scale_kernel,
        out_shape=jax.ShapeDtypeStruct((rows2, S), x.dtype),
        grid=(nS2,),
        in_specs=[pl.BlockSpec((rows2, tS2), lambda s: (0, s)),
                  pl.BlockSpec((rows2, 1), lambda s: (0, 0))],
        out_specs=pl.BlockSpec((rows2, tS2), lambda s: (0, s)),
        compiler_params=pltpu.CompilerParams(
            dimension_semantics=("parallel",),
            vmem_limit_bytes=vmem_limit),
        cost_estimate=pl.CostEstimate(
            flops=rows2 * S, transcendentals=0,
            bytes_accessed=2 * nbytes + rows2 * itemsize),
    )(x_flat.reshape(rows2, S), scale.reshape(rows2, 1))

    return out2.reshape(x.shape)


def se_unit_ref(x, w1, b1, w2, b2):
    """Pure-JAX reference matching the PyTorch forward."""
    B, C = x.shape[0], x.shape[1]
    m = x.reshape(B, C, -1).astype(jnp.float32).mean(-1)                   # (B, C)
    h = GAMMA_RELU * jnp.maximum(m @ w1.astype(jnp.float32).T
                                 + b1.astype(jnp.float32), 0.0)            # (B, Ch)
    s = 2.0 * jax.nn.sigmoid(h @ w2.astype(jnp.float32).T
                             + b2.astype(jnp.float32))                     # (B, C)
    ones = (1,) * (x.ndim - 2)
    return x * s.reshape(B, C, *ones).astype(x.dtype)


if __name__ == "__main__":
    key = jax.random.PRNGKey(0)
    kp, kx1, kx2, kx3, kx4 = jax.random.split(key, 5)

    # num_channels=8, reduction=4 -> hidden=2 (biases zeroed as in SE_unit.__init__)
    B, C, reduction = 2, 8, 4
    Ch = C // reduction
    kw1, kw2 = jax.random.split(kp)
    bound1 = 1.0 / np.sqrt(C)
    bound2 = 1.0 / np.sqrt(Ch)
    w1 = jax.random.uniform(kw1, (Ch, C), jnp.float32, -bound1, bound1)
    b1 = jnp.zeros((Ch,), jnp.float32)
    w2 = jax.random.uniform(kw2, (C, Ch), jnp.float32, -bound2, bound2)
    b2 = jnp.zeros((C,), jnp.float32)

    cases = [
        # (name, key, spatial, dtype, kwargs, rtol, atol)
        ("fused_f32",        kx1, (4, 16, 16), jnp.float32, dict(),              1e-5, 1e-5),
        ("two_pass_f32",     kx2, (3, 16, 16), jnp.float32,
         dict(force_two_pass=True, tile_lanes=256),                              1e-5, 1e-5),
        ("two_pass_partial", kx3, (3, 10, 13), jnp.float32,
         dict(force_two_pass=True, tile_lanes=128),                              1e-5, 1e-5),
        ("fused_bf16",       kx4, (4, 16, 16), jnp.bfloat16, dict(),             2e-2, 2e-2),
    ]

    for name, k, spatial, dtype, kwargs, rtol, atol in cases:
        x = jax.random.normal(k, (B, C) + spatial, dtype=dtype)
        out = jax.block_until_ready(se_unit(x, w1, b1, w2, b2, **kwargs))
        ref = se_unit_ref(x, w1, b1, w2, b2)
        np.testing.assert_allclose(
            np.asarray(out, dtype=np.float32),
            np.asarray(ref, dtype=np.float32),
            rtol=rtol, atol=atol, err_msg=name)

    print("KERNEL_OK")
</pallas_src>

<mosaic_0001>
module attributes {stable_mosaic.version = 11 : i64} {
  func.func @_fused_kernel(%arg0: i32, %arg1: memref<1x8x1024xf32, #tpu.memory_space<vmem>>, %arg2: memref<8x2xf32, #tpu.memory_space<vmem>>, %arg3: memref<1x2xf32, #tpu.memory_space<vmem>>, %arg4: memref<8x2xf32, #tpu.memory_space<vmem>>, %arg5: memref<8x1xf32, #tpu.memory_space<vmem>>, %arg6: memref<1x8x1024xf32, #tpu.memory_space<vmem>>) attributes {dimension_semantics = [#tpu.dimension_semantics<parallel>], iteration_bounds = array<i64: 2>, scalar_prefetch = 0 : i64, scratch_operands = 0 : i64, tpu.core_type = #tpu.core_type<tc>, window_params = [{transform_indices = @transform_0, window_bounds = array<i64: 1, 8, 1024>}, {pipeline_mode = #tpu.pipeline_mode<synchronous>, transform_indices = @transform_1, window_bounds = array<i64: 8, 2>}, {pipeline_mode = #tpu.pipeline_mode<synchronous>, transform_indices = @transform_2, window_bounds = array<i64: 1, 2>}, {pipeline_mode = #tpu.pipeline_mode<synchronous>, transform_indices = @transform_3, window_bounds = array<i64: 8, 2>}, {pipeline_mode = #tpu.pipeline_mode<synchronous>, transform_indices = @transform_4, window_bounds = array<i64: 8, 1>}, {transform_indices = @transform_5, window_bounds = array<i64: 1, 8, 1024>}]} {
    %c0 = arith.constant 0 : index
    %c0_0 = arith.constant 0 : index
    %c0_1 = arith.constant 0 : index
    %0 = vector.load %arg1[%c0, %c0_0, %c0_1] : memref<1x8x1024xf32, #tpu.memory_space<vmem>>, vector<1x8x1024xf32>
    %1 = vector.shape_cast %0 : vector<1x8x1024xf32> to vector<8x1024xf32>
    %cst = arith.constant dense<0.000000e+00> : vector<8xf32>
    %2 = vector.multi_reduction <add>, %1, %cst [1] : vector<8x1024xf32> to vector<8xf32>
    %3 = vector.shape_cast %2 : vector<8xf32> to vector<8x1xf32>
    %cst_2 = arith.constant 9.765625E-4 : f32
    %4 = vector.broadcast %cst_2 : f32 to vector<8x1xf32>
    %5 = arith.mulf %3, %4 : vector<8x1xf32>
    %c0_3 = arith.constant 0 : index
    %c0_4 = arith.constant 0 : index
    %6 = vector.load %arg2[%c0_3, %c0_4] : memref<8x2xf32, #tpu.memory_space<vmem>>, vector<8x2xf32>
    %c0_5 = arith.constant 0 : index
    %c0_6 = arith.constant 0 : index
    %7 = vector.load %arg3[%c0_5, %c0_6] : memref<1x2xf32, #tpu.memory_space<vmem>>, vector<1x2xf32>
    %c0_7 = arith.constant 0 : index
    %c0_8 = arith.constant 0 : index
    %8 = vector.load %arg4[%c0_7, %c0_8] : memref<8x2xf32, #tpu.memory_space<vmem>>, vector<8x2xf32>
    %c0_9 = arith.constant 0 : index
    %c0_10 = arith.constant 0 : index
    %9 = vector.load %arg5[%c0_9, %c0_10] : memref<8x1xf32, #tpu.memory_space<vmem>>, vector<8x1xf32>
    %10 = vector.broadcast %5 : vector<8x1xf32> to vector<8x2xf32>
    %11 = arith.mulf %6, %10 : vector<8x2xf32>
    %cst_11 = arith.constant dense<0.000000e+00> : vector<2xf32>
    %12 = vector.multi_reduction <add>, %11, %cst_11 [0] : vector<8x2xf32> to vector<2xf32>
    %13 = vector.shape_cast %12 : vector<2xf32> to vector<1x2xf32>
    %14 = arith.addf %13, %7 : vector<1x2xf32>
    %cst_12 = arith.constant 0.000000e+00 : f32
    %15 = vector.broadcast %cst_12 : f32 to vector<1x2xf32>
    %16 = arith.maximumf %14, %15 : vector<1x2xf32>
    %cst_13 = arith.constant 1.71285856 : f32
    %17 = vector.broadcast %cst_13 : f32 to vector<1x2xf32>
    %18 = arith.mulf %17, %16 : vector<1x2xf32>
    %19 = vector.broadcast %18 : vector<1x2xf32> to vector<8x2xf32>
    %20 = arith.mulf %8, %19 : vector<8x2xf32>
    %cst_14 = arith.constant dense<0.000000e+00> : vector<8xf32>
    %21 = vector.multi_reduction <add>, %20, %cst_14 [1] : vector<8x2xf32> to vector<8xf32>
    %22 = vector.shape_cast %21 : vector<8xf32> to vector<8x1xf32>
    %23 = arith.addf %22, %9 : vector<8x1xf32>
    %cst_15 = arith.constant 0.000000e+00 : f32
    %24 = vector.broadcast %cst_15 : f32 to vector<8x1xf32>
    %25 = arith.subf %24, %23 : vector<8x1xf32>
    %26 = math.exp %25 : vector<8x1xf32>
    %cst_16 = arith.constant 1.000000e+00 : f32
    %27 = vector.broadcast %cst_16 : f32 to vector<8x1xf32>
    %28 = arith.addf %27, %26 : vector<8x1xf32>
    %cst_17 = arith.constant 2.000000e+00 : f32
    %29 = vector.broadcast %cst_17 : f32 to vector<8x1xf32>
    %30 = arith.divf %29, %28 : vector<8x1xf32>
    %31 = vector.broadcast %30 : vector<8x1xf32> to vector<8x1024xf32>
    %32 = arith.mulf %1, %31 : vector<8x1024xf32>
    %c0_18 = arith.constant 0 : index
    %c0_19 = arith.constant 0 : index
    %c0_20 = arith.constant 0 : index
    %33 = vector.load %arg6[%c0_18, %c0_19, %c0_20] : memref<1x8x1024xf32, #tpu.memory_space<vmem>>, vector<1x8x1024xf32>
    %34 = vector.shape_cast %33 : vector<1x8x1024xf32> to vector<8x1024xf32>
    %35 = vector.shape_cast %32 : vector<8x1024xf32> to vector<1x8x1024xf32>
    tpu.vector_store %arg6[%c0_18, %c0_19, %c0_20], %35 {strides = array<i32>} : memref<1x8x1024xf32, #tpu.memory_space<vmem>>, vector<1x8x1024xf32>,
    return
  }
  func.func @transform_0(%arg0: i32) -> (i32, i32, i32) {
    %c0_i32 = arith.constant 0 : i32
    %c0_i32_0 = arith.constant 0 : i32
    %c0_i32_1 = arith.constant 0 : i32
    return %arg0, %c0_i32, %c0_i32_0 : i32, i32, i32
  }
  func.func @transform_1(%arg0: i32) -> (i32, i32) {
    %c0_i32 = arith.constant 0 : i32
    %c0_i32_0 = arith.constant 0 : i32
    %c0_i32_1 = arith.constant 0 : i32
    return %c0_i32, %c0_i32_0 : i32, i32
  }
  func.func @transform_2(%arg0: i32) -> (i32, i32) {
    %c0_i32 = arith.constant 0 : i32
    %c0_i32_0 = arith.constant 0 : i32
    %c0_i32_1 = arith.constant 0 : i32
    return %c0_i32, %c0_i32_0 : i32, i32
  }
  func.func @transform_3(%arg0: i32) -> (i32, i32) {
    %c0_i32 = arith.constant 0 : i32
    %c0_i32_0 = arith.constant 0 : i32
    %c0_i32_1 = arith.constant 0 : i32
    return %c0_i32, %c0_i32_0 : i32, i32
  }
  func.func @transform_4(%arg0: i32) -> (i32, i32) {
    %c0_i32 = arith.constant 0 : i32
    %c0_i32_0 = arith.constant 0 : i32
    %c0_i32_1 = arith.constant 0 : i32
    return %c0_i32, %c0_i32_0 : i32, i32
  }
  func.func @transform_5(%arg0: i32) -> (i32, i32, i32) {
    %c0_i32 = arith.constant 0 : i32
    %c0_i32_0 = arith.constant 0 : i32
    %c0_i32_1 = arith.constant 0 : i32
    return %arg0, %c0_i32, %c0_i32_0 : i32, i32, i32
  }
}

</mosaic_0001>

<llo_original>
// kernel: se_unit.1
$region0: #{se_unit.1}
  #allocation0 [shape = 'u32[]', space=smem, size = 0x4, offset = 0x4, fixed_abs, tag = 'smem constant byte address 0x4 - core index']
  #allocation1 [shape = 'u32[72,128]{1,0:T(1,128)}', space=vmem, size = 0x9000, scoped, tag = 'internal scratch']
  %s0 = inlined_call_operand.vmem [shape: f32[2,8,1024], index: 0, kind: input, shape index: {}]
  %s1 = inlined_call_operand.vmem [shape: f32[8,2], index: 1, kind: input, shape index: {}]
  %s2 = inlined_call_operand.vmem [shape: f32[1,2], index: 2, kind: input, shape index: {}]
  %s3 = inlined_call_operand.vmem [shape: f32[8,2], index: 3, kind: input, shape index: {}]
  %s4 = inlined_call_operand.vmem [shape: f32[8,1], index: 4, kind: input, shape index: {}]
  %s5 = inlined_call_operand.vmem [shape: f32[2,8,1024], index: 5, kind: output, shape index: {}]
  %s6 = sld [smem:[#allocation0]]
  $region53: #{se_unit.1} parent=0
    _
  %s8 = ssub.s32 1, %s6
  %s9 = scalar_select 0, %s8, %s6
  loop: start=0, step=1, limit=4
  $region2: #{se_unit.1} parent=0 // loop_pre_header
    _
  $region3: #{se_unit.1} parent=0 // loop_header
    %s11 = sphi 0, %s15
    %p12 = scmp.ge.s32.totalorder %s11, 4
    %s21 = sphi 0, %s23
    %s24 = sphi 0, %s21
    %s25 = sphi 0, %s24
    %s41 = sphi 0, %s25
    %s45 = sphi 0, %s45
    %s47 = sphi 0, %s45
    %s48 = sphi 0, %s47
    %s62 = sphi 0, %s48
    %s66 = sphi 0, %s66
    %s68 = sphi 0, %s66
    %s69 = sphi 0, %s68
    %s83 = sphi 0, %s69
    %s87 = sphi 0, %s87
    %s89 = sphi 0, %s87
    %s90 = sphi 0, %s89
    %s104 = sphi 0, %s90
    %s108 = sphi 0, %s108
    %s110 = sphi 0, %s108
    %s111 = sphi 0, %s110
    %s125 = sphi 0, %s111
    %s131 = sphi 0, %s133
    %s134 = sphi 0, %s131
    %s135 = sphi 0, %s134
    %s151 = sphi 0, %s135
  $region4: #{se_unit.1} parent=0 // loop_header_branch
    %14 = sbr.rel (%p12) target = $region8
  $region5: #{se_unit.1} parent=0 // loop_body
    %s16 = ssub.s32 %s11, 1
    %s17 = ssub.s32 %s11, 2
    %s18 = sadd.s32 %s11, 1
    %s19 = ssub.s32 %s11, %s18
    %p20 = scmp.eq.s32.totalorder %s19, 0
    %s22 = sadd.s32 %s21, 1
    %s23 = scalar_select %p20, %s21, %s22
    %p26 = pneg %p20
    %p27 = scmp.eq.s32.totalorder %s11, 1
    %p28 = por %p26, %p27
    %p29 = scmp.ne.s32.totalorder %s21, %s24
    %p30 = scmp.eq.s32.totalorder %s11, 0
    %p31 = por %p29, %p30
    %p32 = scmp.ne.s32.totalorder %s21, %s24
    %p33 = scmp.eq.s32.totalorder %s16, 1
    %p34 = por %p32, %p33
    %p35 = scmp.ne.s32.totalorder %s24, %s25
    %p36 = scmp.eq.s32.totalorder %s16, 0
    %p37 = por %p35, %p36
    %p38 = scmp.ne.s32.totalorder %s24, %s25
    %p39 = scmp.eq.s32.totalorder %s17, 1
    %p40 = por %p38, %p39
    %p42 = scmp.ne.s32.totalorder %s25, %s41
    %p43 = scmp.eq.s32.totalorder %s17, 0
    %p44 = por %p42, %p43
    %s46 = sadd.s32 %s45, 1
    %p49 = scmp.eq.s32.totalorder %s11, 1
    %p50 = scmp.ne.s32.totalorder %s45, %s47
    %p51 = scmp.eq.s32.totalorder %s11, 0
    %p52 = por %p50, %p51
    %p53 = scmp.ne.s32.totalorder %s45, %s47
    %p54 = scmp.eq.s32.totalorder %s16, 1
    %p55 = por %p53, %p54
    %p56 = scmp.ne.s32.totalorder %s47, %s48
    %p57 = scmp.eq.s32.totalorder %s16, 0
    %p58 = por %p56, %p57
    %p59 = scmp.ne.s32.totalorder %s47, %s48
    %p60 = scmp.eq.s32.totalorder %s17, 1
    %p61 = por %p59, %p60
    %p63 = scmp.ne.s32.totalorder %s48, %s62
    %p64 = scmp.eq.s32.totalorder %s17, 0
    %p65 = por %p63, %p64
    %s67 = sadd.s32 %s66, 1
    %p70 = scmp.eq.s32.totalorder %s11, 1
    %p71 = scmp.ne.s32.totalorder %s66, %s68
    %p72 = scmp.eq.s32.totalorder %s11, 0
    %p73 = por %p71, %p72
    %p74 = scmp.ne.s32.totalorder %s66, %s68
    %p75 = scmp.eq.s32.totalorder %s16, 1
    %p76 = por %p74, %p75
    %p77 = scmp.ne.s32.totalorder %s68, %s69
    %p78 = scmp.eq.s32.totalorder %s16, 0
    %p79 = por %p77, %p78
    %p80 = scmp.ne.s32.totalorder %s68, %s69
    %p81 = scmp.eq.s32.totalorder %s17, 1
    %p82 = por %p80, %p81
    %p84 = scmp.ne.s32.totalorder %s69, %s83
    %p85 = scmp.eq.s32.totalorder %s17, 0
    %p86 = por %p84, %p85
    %s88 = sadd.s32 %s87, 1
    %p91 = scmp.eq.s32.totalorder %s11, 1
    %p92 = scmp.ne.s32.totalorder %s87, %s89
    %p93 = scmp.eq.s32.totalorder %s11, 0
    %p94 = por %p92, %p93
    %p95 = scmp.ne.s32.totalorder %s87, %s89
    %p96 = scmp.eq.s32.totalorder %s16, 1
    %p97 = por %p95, %p96
    %p98 = scmp.ne.s32.totalorder %s89, %s90
    %p99 = scmp.eq.s32.totalorder %s16, 0
    %p100 = por %p98, %p99
    %p101 = scmp.ne.s32.totalorder %s89, %s90
    %p102 = scmp.eq.s32.totalorder %s17, 1
    %p103 = por %p101, %p102
    %p105 = scmp.ne.s32.totalorder %s90, %s104
    %p106 = scmp.eq.s32.totalorder %s17, 0
    %p107 = por %p105, %p106
    %s109 = sadd.s32 %s108, 1
    %p112 = scmp.eq.s32.totalorder %s11, 1
    %p113 = scmp.ne.s32.totalorder %s108, %s110
    %p114 = scmp.eq.s32.totalorder %s11, 0
    %p115 = por %p113, %p114
    %p116 = scmp.ne.s32.totalorder %s108, %s110
    %p117 = scmp.eq.s32.totalorder %s16, 1
    %p118 = por %p116, %p117
    %p119 = scmp.ne.s32.totalorder %s110, %s111
    %p120 = scmp.eq.s32.totalorder %s16, 0
    %p121 = por %p119, %p120
    %p122 = scmp.ne.s32.totalorder %s110, %s111
    %p123 = scmp.eq.s32.totalorder %s17, 1
    %p124 = por %p122, %p123
    %p126 = scmp.ne.s32.totalorder %s111, %s125
    %p127 = scmp.eq.s32.totalorder %s17, 0
    %p128 = por %p126, %p127
    %s129 = ssub.s32 %s11, %s18
    %p130 = scmp.eq.s32.totalorder %s129, 0
    %s132 = sadd.s32 %s131, 1
    %s133 = scalar_select %p130, %s131, %s132
    %p136 = pneg %p130
    %p137 = scmp.eq.s32.totalorder %s11, 1
    %p138 = por %p136, %p137
    %p139 = scmp.ne.s32.totalorder %s131, %s134
    %p140 = scmp.eq.s32.totalorder %s11, 0
    %p141 = por %p139, %p140
    %p142 = scmp.ne.s32.totalorder %s131, %s134
    %p143 = scmp.eq.s32.totalorder %s16, 1
    %p144 = por %p142, %p143
    %p145 = scmp.ne.s32.totalorder %s134, %s135
    %p146 = scmp.eq.s32.totalorder %s16, 0
    %p147 = por %p145, %p146
    %p148 = scmp.ne.s32.totalorder %s134, %s135
    %p149 = scmp.eq.s32.totalorder %s17, 1
    %p150 = por %p148, %p149
    %p152 = scmp.ne.s32.totalorder %s135, %s151
    %p153 = scmp.eq.s32.totalorder %s17, 0
    %p154 = por %p152, %p153
    %p155 = scmp.le.s32.totalorder 1, %s11
    %p156 = scmp.lt.s32.totalorder %s11, 3
    %p157 = pnand %p155, %p156
    %p158 = pneg %p157
    // Predicated region
    $region9: #{se_unit.1} parent=5 // pred_check
      _
    $region10: #{se_unit.1} parent=5 // pred_check_branch
      %160 = sbr.rel (%p157) target = $region12
    $region11: #{se_unit.1} parent=5 // pred_region
      %s161 = ssub.s32 %s11, 1
      // Predicated region
      $region13: #{se_unit.1} parent=11 // pred_check
        %p162 = pneg %p58
      $region14: #{se_unit.1} parent=11 // pred_check_branch
        %164 = sbr.rel (%p162) target = $region16
      $region15: #{se_unit.1} parent=11 // pred_region
        _
      $region16: #{se_unit.1} parent=11 // pred_fallthru
        _
      // Predicated region
      $region17: #{se_unit.1} parent=11 // pred_check
        %p165 = pneg %p79
      $region18: #{se_unit.1} parent=11 // pred_check_branch
        %167 = sbr.rel (%p165) target = $region20
      $region19: #{se_unit.1} parent=11 // pred_region
        _
      $region20: #{se_unit.1} parent=11 // pred_fallthru
        _
      // Predicated region
      $region21: #{se_unit.1} parent=11 // pred_check
        %p168 = pneg %p100
      $region22: #{se_unit.1} parent=11 // pred_check_branch
        %170 = sbr.rel (%p168) target = $region24
      $region23: #{se_unit.1} parent=11 // pred_region
        _
      $region24: #{se_unit.1} parent=11 // pred_fallthru
        _
      // Predicated region
      $region25: #{se_unit.1} parent=11 // pred_check
        %p171 = pneg %p121
      $region26: #{se_unit.1} parent=11 // pred_check_branch
        %173 = sbr.rel (%p171) target = $region28
      $region27: #{se_unit.1} parent=11 // pred_region
        _
      $region28: #{se_unit.1} parent=11 // pred_fallthru
        _
    $region12: #{se_unit.1} parent=5 // pred_fallthru
      _
    %p174 = scmp.lt.s32.totalorder %s11, 2
    // Predicated region
    $region29: #{se_unit.1} parent=5 // pred_check
      %p175 = pneg %p174
    $region30: #{se_unit.1} parent=5 // pred_check_branch
      %177 = sbr.rel (%p175) target = $region32
    $region31: #{se_unit.1} parent=5 // pred_region
      // Predicated region
      $region33: #{se_unit.1} parent=31 // pred_check
        %p178 = pneg %p31
      $region34: #{se_unit.1} parent=31 // pred_check_branch
        %180 = sbr.rel (%p178) target = $region36
      $region35: #{se_unit.1} parent=31 // pred_region
        %p181 = scmp.lt.s32.totalorder %s11, 1
        %s182 = scalar_select %p181, %s11, 1
        %s183 = smul.addr %s182, 8
        %s184 = smul.addr %s183, 8
        %s185 = scalar_lea.vmem %s0, %s184
      $region36: #{se_unit.1} parent=31 // pred_fallthru
        _
    $region32: #{se_unit.1} parent=5 // pred_fallthru
      _
    %p186 = scmp.le.s32.totalorder 1, %s11
    %p187 = scmp.lt.s32.totalorder %s11, 3
    %p188 = pnand %p186, %p187
    %p189 = pneg %p188
    // Predicated region
    $region37: #{se_unit.1} parent=5 // pred_check
      _
    $region38: #{se_unit.1} parent=5 // pred_check_branch
      %191 = sbr.rel (%p188) target = $region40
    $region39: #{se_unit.1} parent=5 // pred_region
      %s192 = ssub.s32 %s11, 1
      %p193 = scmp.lt.s32.totalorder %s16, 1
      %s194 = scalar_select %p193, %s16, 1
      %s195 = smul.addr %s194, 8
      %s196 = smul.addr %s195, 8
      %s197 = scalar_lea.vmem %s0, %s196
      %p198 = pneg %p37
      %p199 = pneg %p34
      %p200 = pneg %p58
      %p201 = pneg %p55
      %p202 = pneg %p79
      %p203 = pneg %p76
      %p204 = pneg %p100
      %p205 = pneg %p97
      %p206 = pneg %p121
      %p207 = pneg %p118
      %p208 = pneg %p147
      %p209 = pneg %p144
      %p210 = scmp.lt.s32.totalorder %s16, 1
      %s211 = scalar_select %p210, %s16, 1
      %s212 = smul.addr %s211, 8
      %s213 = smul.addr %s212, 8
      %s214 = scalar_lea.vmem %s5, %s213
      %p215 = scmp.lt.s32.totalorder %s16, 1
      %s216 = scalar_select %p215, %s16, 1
      %s217 = smul.addr %s216, 8
      %s218 = smul.addr %s217, 8
      %s219 = scalar_lea.vmem %s0, %s218
      %p220 = scmp.lt.s32.totalorder %s16, 1
      %s221 = scalar_select %p220, %s16, 1
      %s222 = smul.addr %s221, 8
      %s223 = smul.addr %s222, 8
      %s224 = scalar_lea.vmem %s5, %s223
      %v225 = vld [vmem:[%s219] sm:$0xff]
      %v226 = vld [vmem:[%s219 + $0x8] sm:$0xff]
      %v227 = vld [vmem:[%s219 + $0x10] sm:$0xff]
      %v228 = vld [vmem:[%s219 + $0x18] sm:$0xff]
      %v229 = vld [vmem:[%s219 + $0x20] sm:$0xff]
      %v230 = vld [vmem:[%s219 + $0x28] sm:$0xff]
      %v231 = vld [vmem:[%s219 + $0x30] sm:$0xff]
      %v232 = vld [vmem:[%s219 + $0x38] sm:$0xff]
      %v233 = vadd.f32 %v225, %v226
      %v234 = vadd.f32 %v233, %v227
      %v235 = vadd.f32 %v234, %v228
      %v236 = vadd.f32 %v235, %v229
      %v237 = vadd.f32 %v236, %v230
      %v238 = vadd.f32 %v237, %v231
      %v239 = vadd.f32 %v238, %v232
      %240 = vadd.xlane.f32.xlu0 %v239
      %v241 = vpop.xlane.xlu0 %240
      %v242 = vmul.f32 %v241, 0.0009765625
      %v243 = vld [vmem:[%s1] sm:$0xff]
      %v244 = vld [vmem:[%s2] sm:$0x1]
      %v245 = vld [vmem:[%s3] sm:$0xff]
      %v246 = vld [vmem:[%s4] sm:$0xff]
      %v247 = vmul.f32 %v243, %v242
      %vm248 = vcmask 15360
      %v249 = vsel %vm248, %v247, 0.0
      %v250 = vrot.slane %v249, 4
      %v251 = vadd.f32 %v249, %v250
      %v252 = vrot.slane %v251, 2
      %v253 = vadd.f32 %v251, %v252
      %v254 = vrot.slane %v253, 1
      %v255 = vadd.f32 %v253, %v254
      %v256 = vadd.f32 %v255, %v244
      %v257 = vmax.f32 %v256, 0.0
      %v258 = vmul.f32 %v257, 1.7128586
      %v259 = vperm.slane %v258, 0
      %v260 = vmul.f32 %v245, %v259
      %v261 = vsel %vm248, %v260, 0.0
      %262 = vadd.xlane.f32.xlu0 %v261
      %v263 = vpop.xlane.xlu0 %262
      %v264 = vadd.f32 %v263, %v246
      %v265 = vsub.f32 0.0, %v264
      %v266 = vmul.f32 %v265, 1.442695
      %v267 = vpow.pop %v266
      %v268 = vadd.f32 %v267, 1.0
      %v269 = vrcp.pop %v268
      %v270 = vmul.f32 %v268, %v269
      %v271 = vsub.f32 1.0, %v270
      %v272 = vmul.f32 %v269, %v271
      %v273 = vadd.f32 %v269, %v272
      %vm274 = vweird.f32 %v268
      %vm275 = vweird.f32 %v269
      %vm276 = vmor %vm274, %vm275
      %v277 = vsel %vm276, %v269, %v273
      %v278 = vand.u32 2147483647, %v268
      %vm279 = vcmp.eq.f32.partialorder %v278, 8.507059e+37
      %v280 = vand.u32 %v268, 2147483648
      %v281 = vor.u32 1.1754944e-38, %v280
      %v282 = vsel %vm279, %v281, %v277
      %v283 = vmul.f32 2.0, %v282
      %285 = vset.pattern.permute.xlu0 0
      %286 = vperm.xlu0 %285, %v283
      %v287 = vpop.permute.xlu0 %286
      %v289 = vmul.f32 %v225, %v287
      %v290 = vmul.f32 %v226, %v287
      %v291 = vmul.f32 %v227, %v287
      %v292 = vmul.f32 %v228, %v287
      %v293 = vmul.f32 %v229, %v287
      %v294 = vmul.f32 %v230, %v287
      %v295 = vmul.f32 %v231, %v287
      %v296 = vmul.f32 %v232, %v287
      %297 = vst [vmem:[%s224] sm:$0xff] %v289
      %298 = vst [vmem:[%s224 + $0x8] sm:$0xff] %v290
      %299 = vst [vmem:[%s224 + $0x10] sm:$0xff] %v291
      %300 = vst [vmem:[%s224 + $0x18] sm:$0xff] %v292
      %301 = vst [vmem:[%s224 + $0x20] sm:$0xff] %v293
      %302 = vst [vmem:[%s224 + $0x28] sm:$0xff] %v294
      %303 = vst [vmem:[%s224 + $0x30] sm:$0xff] %v295
      %304 = vst [vmem:[%s224 + $0x38] sm:$0xff] %v296
      %p305 = scmp.lt.s32.totalorder %s16, 1
      %s306 = scalar_select %p305, %s16, 1
      %s307 = smul.addr %s306, 8
      %s308 = smul.addr %s307, 8
      %s309 = scalar_lea.vmem %s5, %s308
      // Predicated region
      $region41: #{se_unit.1} parent=39 // pred_check
        %p310 = pneg %p144
      $region42: #{se_unit.1} parent=39 // pred_check_branch
        %312 = sbr.rel (%p310) target = $region44
      $region43: #{se_unit.1} parent=39 // pred_region
        _
      $region44: #{se_unit.1} parent=39 // pred_fallthru
        _
    $region40: #{se_unit.1} parent=5 // pred_fallthru
      _
    %p313 = scmp.le.s32.totalorder 2, %s11
    // Predicated region
    $region45: #{se_unit.1} parent=5 // pred_check
      %p314 = pneg %p313
    $region46: #{se_unit.1} parent=5 // pred_check_branch
      %316 = sbr.rel (%p314) target = $region48
    $region47: #{se_unit.1} parent=5 // pred_region
      %s317 = ssub.s32 %s11, 2
      // Predicated region
      $region49: #{se_unit.1} parent=47 // pred_check
        %p318 = pneg %p150
      $region50: #{se_unit.1} parent=47 // pred_check_branch
        %320 = sbr.rel (%p318) target = $region52
      $region51: #{se_unit.1} parent=47 // pred_region
        %p321 = scmp.lt.s32.totalorder %s17, 1
        %s322 = scalar_select %p321, %s17, 1
        %s323 = smul.addr %s322, 8
        %s324 = smul.addr %s323, 8
        %s325 = scalar_lea.vmem %s5, %s324
      $region52: #{se_unit.1} parent=47 // pred_fallthru
        _
    $region48: #{se_unit.1} parent=5 // pred_fallthru
      _
  $region6: #{se_unit.1} parent=0 // loop_footer
    %s15 = sadd.s32 1, %s11
  $region7: #{se_unit.1} parent=0 // loop_footer_branch
    %10 = sbr.rel target = $region3
  $region8: #{se_unit.1} parent=0 // loop_exit
    _

</llo_original>
